<compile_context>
chip_gen: v7x
topology: tpu7x:2x2x1
jax: 0.10.0
libtpu: 0.0.40
codegen_flags: <defaults>
</compile_context>

<pallas_src>
import jax
import jax.numpy as jnp
from jax import lax
from jax.experimental import pallas as pl
from jax.experimental.pallas import tpu as pltpu


def _round_up(x: int, m: int) -> int:
    return ((x + m - 1) // m) * m


def _pick_row_tile(n_rows: int, h: int, l_pad: int, itemsize: int) -> int:
    """Largest row tile (multiple of 8, <=1024) whose double-buffered input +
    output tiles stay under ~8 MiB, leaving headroom for resident weights."""
    budget = 8 * 1024 * 1024
    per_row = (h + l_pad) * itemsize * 2  # 2x for double buffering
    tm = max(8, min(1024, budget // max(per_row, 1)))
    tm = (tm // 8) * 8
    return min(tm, _round_up(n_rows, 8))


def _head_kernel(x_ref, w1_ref, b1_ref, w2_ref, b2_ref, o_ref):
    """Fused head: tanh(x @ W1^T + b1) @ W2^T + b2 for one row tile.

    x_ref : [TM, H]      feature rows (flattened batch*time)
    w1_ref: [H, H]       dense weight, PyTorch (out, in) layout
    b1_ref: [1, H]       dense bias
    w2_ref: [Lpad, H]    out_proj weight, (out, in) layout, zero-padded to Lpad
    b2_ref: [1, Lpad]    out_proj bias, zero-padded
    o_ref : [TM, Lpad]   lane-dense logits (padded)
    """
    # NOTE: nn.Dropout is identity in eval mode; inference semantics implemented.
    x = x_ref[...]

    # x @ W1^T : contract x's last dim with W1's "in" dim (no transpose in HBM).
    h = lax.dot_general(
        x, w1_ref[...],
        dimension_numbers=(((1,), (1,)), ((), ())),
        preferred_element_type=jnp.float32,
    ) + b1_ref[...]
    h = jnp.tanh(h)  # EUP transcendental; kept in f32.

    # h @ W2^T : again contract on the "in" dim of the (padded) weight.
    out = lax.dot_general(
        h, w2_ref[...],
        dimension_numbers=(((1,), (1,)), ((), ())),
        preferred_element_type=jnp.float32,
    ) + b2_ref[...]

    o_ref[...] = out.astype(o_ref.dtype)


@jax.jit
def model_head_forward(features, w_dense, b_dense, w_out, b_out):
    """features: [B, T, H] float32. Weights in PyTorch Linear layout [out, in].

    Returns logits [B, T, num_labels].
    """
    B, T, H = features.shape
    L = w_out.shape[0]
    N = B * T

    itemsize = jnp.dtype(features.dtype).itemsize
    L_pad = _round_up(max(L, 1), 128)            # lane-dense output stores
    TM = _pick_row_tile(N, H, L_pad, itemsize)   # streamed row tile
    N_pad = _round_up(N, TM)

    x2d = features.reshape(N, H)
    if N_pad != N:
        x2d = jnp.pad(x2d, ((0, N_pad - N), (0, 0)))

    # Zero-pad out_proj weight/bias to lane width; padded logit columns are 0.
    w2p = jnp.pad(w_out, ((0, L_pad - L), (0, 0)))
    b2p = jnp.pad(b_out, (0, L_pad - L)).reshape(1, L_pad)
    b1 = b_dense.reshape(1, H)

    grid = (N_pad // TM,)

    cost = pl.CostEstimate(
        flops=2 * N_pad * H * H + 2 * N_pad * H * L_pad,
        transcendentals=N_pad * H,
        bytes_accessed=(N_pad * H + H * H + H + L_pad * H + L_pad
                        + N_pad * L_pad) * itemsize,
    )

    out2d = pl.pallas_call(
        _head_kernel,
        out_shape=jax.ShapeDtypeStruct((N_pad, L_pad), features.dtype),
        grid=grid,
        in_specs=[
            pl.BlockSpec((TM, H), lambda i: (i, 0)),        # streamed rows
            pl.BlockSpec((H, H), lambda i: (0, 0)),         # resident W1 (out,in)
            pl.BlockSpec((1, H), lambda i: (0, 0)),         # resident b1
            pl.BlockSpec((L_pad, H), lambda i: (0, 0)),     # resident W2 (padded)
            pl.BlockSpec((1, L_pad), lambda i: (0, 0)),     # resident b2 (padded)
        ],
        out_specs=pl.BlockSpec((TM, L_pad), lambda i: (i, 0)),
        compiler_params=pltpu.CompilerParams(
            dimension_semantics=("parallel",),   # v7x: split row tiles across 2 TCs
            vmem_limit_bytes=32 * 1024 * 1024,   # fits v5e/v6e/v7x scoped budgets
        ),
        cost_estimate=cost,
    )(x2d, w_dense, b1, w2p, b2p)

    return out2d[:N, :L].reshape(B, T, L)


def _reference(features, w_dense, b_dense, w_out, b_out):
    h = jnp.tanh(features @ w_dense.T + b_dense)
    return h @ w_out.T + b_out


if __name__ == "__main__":
    # Small shapes consistent with the module: hidden_size=32, num_labels=5.
    B, T, H, L = 2, 8, 32, 5
    key = jax.random.PRNGKey(0)
    k_x, k_w1, k_b1, k_w2, k_b2 = jax.random.split(key, 5)

    features = jax.random.normal(k_x, (B, T, H), dtype=jnp.float32)

    # Deterministic synthetic parameters (PyTorch Linear layout: [out, in]).
    w_dense = jax.random.normal(k_w1, (H, H), dtype=jnp.float32) * (1.0 / H**0.5)
    b_dense = jax.random.normal(k_b1, (H,), dtype=jnp.float32) * 0.01
    w_out   = jax.random.normal(k_w2, (L, H), dtype=jnp.float32) * (1.0 / H**0.5)
    b_out   = jax.random.normal(k_b2, (L,), dtype=jnp.float32) * 0.01

    out = model_head_forward(features, w_dense, b_dense, w_out, b_out)
    jax.block_until_ready(out)

    ref = _reference(features, w_dense, b_dense, w_out, b_out)
    assert out.shape == (B, T, L)
    assert jnp.allclose(out, ref, atol=1e-4, rtol=1e-4), "mismatch vs reference"

    print("KERNEL_OK")
</pallas_src>

<mosaic_0001>
module attributes {stable_mosaic.version = 11 : i64} {
  func.func @_head_kernel(%arg0: i32, %arg1: memref<16x32xf32, #tpu.memory_space<vmem>>, %arg2: memref<32x32xf32, #tpu.memory_space<vmem>>, %arg3: memref<1x32xf32, #tpu.memory_space<vmem>>, %arg4: memref<128x32xf32, #tpu.memory_space<vmem>>, %arg5: memref<1x128xf32, #tpu.memory_space<vmem>>, %arg6: memref<16x128xf32, #tpu.memory_space<vmem>>) attributes {dimension_semantics = [#tpu.dimension_semantics<parallel>], iteration_bounds = array<i64: 1>, scalar_prefetch = 0 : i64, scratch_operands = 0 : i64, tpu.core_type = #tpu.core_type<tc>, window_params = [{transform_indices = @transform_0, window_bounds = array<i64: 16, 32>}, {pipeline_mode = #tpu.pipeline_mode<synchronous>, transform_indices = @transform_1, window_bounds = array<i64: 32, 32>}, {pipeline_mode = #tpu.pipeline_mode<synchronous>, transform_indices = @transform_2, window_bounds = array<i64: 1, 32>}, {pipeline_mode = #tpu.pipeline_mode<synchronous>, transform_indices = @transform_3, window_bounds = array<i64: 128, 32>}, {pipeline_mode = #tpu.pipeline_mode<synchronous>, transform_indices = @transform_4, window_bounds = array<i64: 1, 128>}, {transform_indices = @transform_5, window_bounds = array<i64: 16, 128>}]} {
    %c0 = arith.constant 0 : index
    %c0_0 = arith.constant 0 : index
    %0 = vector.load %arg1[%c0, %c0_0] : memref<16x32xf32, #tpu.memory_space<vmem>>, vector<16x32xf32>
    %c0_1 = arith.constant 0 : index
    %c0_2 = arith.constant 0 : index
    %1 = vector.load %arg2[%c0_1, %c0_2] : memref<32x32xf32, #tpu.memory_space<vmem>>, vector<32x32xf32>
    %cst = arith.constant dense<0.000000e+00> : vector<16x32xf32>
    %2 = tpu.matmul %0, %1, %cst {dimension_numbers = #tpu.dot_dimension_numbers<[1], [1], [0], [0], [0, 0, 1, 0], [], []>} : vector<16x32xf32>, vector<32x32xf32>, vector<16x32xf32> -> vector<16x32xf32>
    %c0_3 = arith.constant 0 : index
    %c0_4 = arith.constant 0 : index
    %3 = vector.load %arg3[%c0_3, %c0_4] : memref<1x32xf32, #tpu.memory_space<vmem>>, vector<1x32xf32>
    %4 = vector.broadcast %3 : vector<1x32xf32> to vector<16x32xf32>
    %5 = arith.addf %2, %4 : vector<16x32xf32>
    %6 = math.tanh %5 : vector<16x32xf32>
    %c0_5 = arith.constant 0 : index
    %c0_6 = arith.constant 0 : index
    %7 = vector.load %arg4[%c0_5, %c0_6] : memref<128x32xf32, #tpu.memory_space<vmem>>, vector<128x32xf32>
    %cst_7 = arith.constant dense<0.000000e+00> : vector<16x128xf32>
    %8 = tpu.matmul %6, %7, %cst_7 {dimension_numbers = #tpu.dot_dimension_numbers<[1], [1], [0], [0], [0, 0, 1, 0], [], []>} : vector<16x32xf32>, vector<128x32xf32>, vector<16x128xf32> -> vector<16x128xf32>
    %c0_8 = arith.constant 0 : index
    %c0_9 = arith.constant 0 : index
    %9 = vector.load %arg5[%c0_8, %c0_9] : memref<1x128xf32, #tpu.memory_space<vmem>>, vector<1x128xf32>
    %10 = vector.broadcast %9 : vector<1x128xf32> to vector<16x128xf32>
    %11 = arith.addf %8, %10 : vector<16x128xf32>
    %c0_10 = arith.constant 0 : index
    %c0_11 = arith.constant 0 : index
    %12 = vector.load %arg6[%c0_10, %c0_11] : memref<16x128xf32, #tpu.memory_space<vmem>>, vector<16x128xf32>
    tpu.vector_store %arg6[%c0_10, %c0_11], %11 {strides = array<i32>} : memref<16x128xf32, #tpu.memory_space<vmem>>, vector<16x128xf32>,
    return
  }
  func.func @transform_0(%arg0: i32) -> (i32, i32) {
    %c0_i32 = arith.constant 0 : i32
    %c0_i32_0 = arith.constant 0 : i32
    return %arg0, %c0_i32 : i32, i32
  }
  func.func @transform_1(%arg0: i32) -> (i32, i32) {
    %c0_i32 = arith.constant 0 : i32
    %c0_i32_0 = arith.constant 0 : i32
    %c0_i32_1 = arith.constant 0 : i32
    return %c0_i32, %c0_i32_0 : i32, i32
  }
  func.func @transform_2(%arg0: i32) -> (i32, i32) {
    %c0_i32 = arith.constant 0 : i32
    %c0_i32_0 = arith.constant 0 : i32
    %c0_i32_1 = arith.constant 0 : i32
    return %c0_i32, %c0_i32_0 : i32, i32
  }
  func.func @transform_3(%arg0: i32) -> (i32, i32) {
    %c0_i32 = arith.constant 0 : i32
    %c0_i32_0 = arith.constant 0 : i32
    %c0_i32_1 = arith.constant 0 : i32
    return %c0_i32, %c0_i32_0 : i32, i32
  }
  func.func @transform_4(%arg0: i32) -> (i32, i32) {
    %c0_i32 = arith.constant 0 : i32
    %c0_i32_0 = arith.constant 0 : i32
    %c0_i32_1 = arith.constant 0 : i32
    return %c0_i32, %c0_i32_0 : i32, i32
  }
  func.func @transform_5(%arg0: i32) -> (i32, i32) {
    %c0_i32 = arith.constant 0 : i32
    %c0_i32_0 = arith.constant 0 : i32
    return %arg0, %c0_i32 : i32, i32
  }
}

</mosaic_0001>

<llo_original>
// kernel: model_head_forward.1
$region0: #{model_head_forward.1}
  #allocation0 [shape = 'u32[]', space=smem, size = 0x4, offset = 0x4, fixed_abs, tag = 'smem constant byte address 0x4 - core index']
  #allocation1 [shape = 'u32[144,128]{1,0:T(1,128)}', space=vmem, size = 0x12000, scoped, tag = 'internal scratch']
  %s0 = inlined_call_operand.vmem [shape: f32[16,32], index: 0, kind: input, shape index: {}]
  %s1 = inlined_call_operand.vmem [shape: f32[32,32], index: 1, kind: input, shape index: {}]
  %s2 = inlined_call_operand.vmem [shape: f32[1,32], index: 2, kind: input, shape index: {}]
  %s3 = inlined_call_operand.vmem [shape: f32[128,32], index: 3, kind: input, shape index: {}]
  %s4 = inlined_call_operand.vmem [shape: f32[1,128], index: 4, kind: input, shape index: {}]
  %s5 = inlined_call_operand.vmem [shape: f32[16,128], index: 5, kind: output, shape index: {}]
  %s6 = sld [smem:[#allocation0]]
  $region30: #{model_head_forward.1} parent=0
    _
  %s8 = ssub.s32 1, %s6
  %s9 = scalar_select 0, %s8, %s6
  // Predicated region
  $region2: #{model_head_forward.1} parent=0 // pred_check
    _
  $region3: #{model_head_forward.1} parent=0 // pred_check_branch
    %11 = sbr.rel (0) target = $region5
  $region4: #{model_head_forward.1} parent=0 // pred_region
    _
  $region5: #{model_head_forward.1} parent=0 // pred_fallthru
    _
  // Predicated region
  $region6: #{model_head_forward.1} parent=0 // pred_check
    _
  $region7: #{model_head_forward.1} parent=0 // pred_check_branch
    %13 = sbr.rel (0) target = $region9
  $region8: #{model_head_forward.1} parent=0 // pred_region
    _
  $region9: #{model_head_forward.1} parent=0 // pred_fallthru
    _
  // Predicated region
  $region10: #{model_head_forward.1} parent=0 // pred_check
    _
  $region11: #{model_head_forward.1} parent=0 // pred_check_branch
    %15 = sbr.rel (0) target = $region13
  $region12: #{model_head_forward.1} parent=0 // pred_region
    _
  $region13: #{model_head_forward.1} parent=0 // pred_fallthru
    _
  // Predicated region
  $region14: #{model_head_forward.1} parent=0 // pred_check
    _
  $region15: #{model_head_forward.1} parent=0 // pred_check_branch
    %17 = sbr.rel (0) target = $region17
  $region16: #{model_head_forward.1} parent=0 // pred_region
    _
  $region17: #{model_head_forward.1} parent=0 // pred_fallthru
    _
  // Predicated region
  $region18: #{model_head_forward.1} parent=0 // pred_check
    _
  $region19: #{model_head_forward.1} parent=0 // pred_check_branch
    %19 = sbr.rel (0) target = $region21
  $region20: #{model_head_forward.1} parent=0 // pred_region
    _
  $region21: #{model_head_forward.1} parent=0 // pred_fallthru
    _
  %v20 = vld [vmem:[%s0] sm:$0xff]
  %v21 = vld [vmem:[%s0 + $0x8] sm:$0xff]
  %v22 = vld [vmem:[%s1] sm:$0xff]
  %v23 = vld [vmem:[%s1 + $0x8] sm:$0xff]
  %v24 = vld [vmem:[%s1 + $0x10] sm:$0xff]
  %v25 = vld [vmem:[%s1 + $0x18] sm:$0xff]
  %v26 = vld [vmem:[%s2] sm:$0x1]
  %v28 = vlaneseq
  %v29 = vshrl.u32 %v28, 7
  %v30 = vsub.s32 0, %v29
  %v31 = vrot.slane %v26, %v30
  %vm33 = vcmask 261120
  %v35 = vsel %vm33, %v20, 0
  %v38 = vsel %vm33, %v21, 0
  %v41 = vsel %vm33, %v22, 0
  %v44 = vsel %vm33, %v23, 0
  %v47 = vsel %vm33, %v24, 0
  %v50 = vsel %vm33, %v25, 0
  %52 = vmatprep.subr.mxu0 0.0
  %53 = vmatpush1.xpose.msra.mxu0 %v41
  %54 = vmatprep.subr.mxu0 0.0
  %55 = vmatpush1.xpose.msra.mxu0 %v44
  %56 = vmatprep.subr.mxu0 0.0
  %57 = vmatpush1.xpose.msra.mxu0 %v47
  %58 = vmatprep.subr.mxu0 0.0
  %59 = vmatpush1.xpose.msra.mxu0 %v50
  %60 = vmatprep.subr.mxu0 0.0
  %61 = vmatpush1.xpose.msra.mxu0 0.0
  %62 = vmatprep.subr.mxu0 0.0
  %63 = vmatpush1.xpose.msra.mxu0 0.0
  %64 = vmatprep.subr.mxu0 0.0
  %65 = vmatpush1.xpose.msra.mxu0 0.0
  %66 = vmatprep.subr.mxu0 0.0
  %67 = vmatpush1.xpose.msra.mxu0 0.0
  %68 = vmatprep.subr.mxu0 0.0
  %69 = vmatpush1.xpose.msra.mxu0 0.0
  %70 = vmatprep.subr.mxu0 0.0
  %71 = vmatpush1.xpose.msra.mxu0 0.0
  %72 = vmatprep.subr.mxu0 0.0
  %73 = vmatpush1.xpose.msra.mxu0 0.0
  %74 = vmatprep.subr.mxu0 0.0
  %75 = vmatpush1.xpose.msra.mxu0 0.0
  %76 = vmatprep.subr.mxu0 0.0
  %77 = vmatpush1.xpose.msra.mxu0 0.0
  %78 = vmatprep.subr.mxu0 0.0
  %79 = vmatpush1.xpose.msra.mxu0 0.0
  %80 = vmatprep.subr.mxu0 0.0
  %81 = vmatpush1.xpose.msra.mxu0 0.0
  %82 = vmatprep.subr.mxu0 0.0
  %83 = vmatpush1.xpose.msra.mxu0 0.0
  %84 = vmatprep.subr.mxu0 0.0
  %85 = vmatpush1.xpose.msra.mxu0 0.0
  %86 = vmatprep.subr.mxu0 0.0
  %87 = vmatpush1.xpose.msra.mxu0 0.0
  %88 = vmatprep.subr.mxu0 0.0
  %89 = vmatpush1.xpose.msra.mxu0 0.0
  %90 = vmatprep.subr.mxu0 0.0
  %91 = vmatpush1.xpose.msra.mxu0 0.0
  %92 = vmatprep.subr.mxu0 0.0
  %93 = vmatpush1.xpose.msra.mxu0 0.0
  %94 = vmatprep.subr.mxu0 0.0
  %95 = vmatpush1.xpose.msra.mxu0 0.0
  %96 = vmatprep.subr.mxu0 0.0
  %97 = vmatpush1.xpose.msra.mxu0 0.0
  %98 = vmatprep.subr.mxu0 0.0
  %99 = vmatpush1.xpose.msra.mxu0 0.0
  %100 = vmatprep.subr.mxu0 0.0
  %101 = vmatpush1.xpose.msra.mxu0 0.0
  %102 = vmatprep.subr.mxu0 0.0
  %103 = vmatpush1.xpose.msra.mxu0 0.0
  %104 = vmatprep.subr.mxu0 0.0
  %105 = vmatpush1.xpose.msra.mxu0 0.0
  %106 = vmatprep.subr.mxu0 0.0
  %107 = vmatpush1.xpose.msra.mxu0 0.0
  %108 = vmatprep.subr.mxu0 0.0
  %109 = vmatpush1.xpose.msra.mxu0 0.0
  %110 = vmatprep.subr.mxu0 0.0
  %111 = vmatpush1.xpose.msra.mxu0 0.0
  %112 = vmatprep.subr.mxu0 0.0
  %113 = vmatpush1.xpose.msra.mxu0 0.0
  %114 = vmatprep.subr.mxu0 0.0
  %115 = vmatpush1.xpose.msra.mxu0 0.0
  %116 = vmatprep.mubr.f32.mxu0 0.0
  %117 = vmatmul.mubr.f32.gmra.mrb[0].mxu0 %v35
  %v118 = vpop.f32.mrb[0].mxu0
  %v119 = vadd.f32 %v31, %v118
  %v120 = vpop.f32.mrb[0].mxu0
  %121 = vmatprep.mubr.f32.mxu0 0.0
  %122 = vmatmul.mubr.f32.gmra.mrb[0].mxu0 %v38
  %v123 = vpop.f32.mrb[0].mxu0
  %v124 = vadd.f32 %v31, %v123
  %v125 = vpop.f32.mrb[0].mxu0
  %126 = vdwg.mxu0
  %v127 = vtanh.pop %v119
  %v128 = vtanh.pop %v124
  %v129 = vld [vmem:[%s3] sm:$0xff]
  %v130 = vld [vmem:[%s3 + $0x8] sm:$0xff]
  %v131 = vld [vmem:[%s3 + $0x10] sm:$0xff]
  %v132 = vld [vmem:[%s3 + $0x18] sm:$0xff]
  %v133 = vld [vmem:[%s3 + $0x20] sm:$0xff]
  %v134 = vld [vmem:[%s3 + $0x28] sm:$0xff]
  %v135 = vld [vmem:[%s3 + $0x30] sm:$0xff]
  %v136 = vld [vmem:[%s3 + $0x38] sm:$0xff]
  %v137 = vld [vmem:[%s3 + $0x40] sm:$0xff]
  %v138 = vld [vmem:[%s3 + $0x48] sm:$0xff]
  %v139 = vld [vmem:[%s3 + $0x50] sm:$0xff]
  %v140 = vld [vmem:[%s3 + $0x58] sm:$0xff]
  %v141 = vld [vmem:[%s3 + $0x60] sm:$0xff]
  %v142 = vld [vmem:[%s3 + $0x68] sm:$0xff]
  %v143 = vld [vmem:[%s3 + $0x70] sm:$0xff]
  %v144 = vld [vmem:[%s3 + $0x78] sm:$0xff]
  %v145 = vld [vmem:[%s4] sm:$0x1]
  %v147 = vlaneseq
  %v148 = vshrl.u32 %v147, 7
  %v149 = vsub.s32 0, %v148
  %v150 = vrot.slane %v145, %v149
  %v153 = vsel %vm33, %v127, 0
  %v156 = vsel %vm33, %v128, 0
  %v159 = vsel %vm33, %v129, 0
  %v162 = vsel %vm33, %v130, 0
  %v165 = vsel %vm33, %v131, 0
  %v168 = vsel %vm33, %v132, 0
  %v171 = vsel %vm33, %v133, 0
  %v174 = vsel %vm33, %v134, 0
  %v177 = vsel %vm33, %v135, 0
  %v180 = vsel %vm33, %v136, 0
  %v183 = vsel %vm33, %v137, 0
  %v186 = vsel %vm33, %v138, 0
  %v189 = vsel %vm33, %v139, 0
  %v192 = vsel %vm33, %v140, 0
  %v195 = vsel %vm33, %v141, 0
  %v198 = vsel %vm33, %v142, 0
  %v201 = vsel %vm33, %v143, 0
  %v204 = vsel %vm33, %v144, 0
  %206 = vmatprep.subr.mxu0 0.0
  %207 = vmatpush1.xpose.msra.mxu0 %v159
  %208 = vmatprep.subr.mxu0 0.0
  %209 = vmatpush1.xpose.msra.mxu0 %v162
  %210 = vmatprep.subr.mxu0 0.0
  %211 = vmatpush1.xpose.msra.mxu0 %v165
  %212 = vmatprep.subr.mxu0 0.0
  %213 = vmatpush1.xpose.msra.mxu0 %v168
  %214 = vmatprep.subr.mxu0 0.0
  %215 = vmatpush1.xpose.msra.mxu0 %v171
  %216 = vmatprep.subr.mxu0 0.0
  %217 = vmatpush1.xpose.msra.mxu0 %v174
  %218 = vmatprep.subr.mxu0 0.0
  %219 = vmatpush1.xpose.msra.mxu0 %v177
  %220 = vmatprep.subr.mxu0 0.0
  %221 = vmatpush1.xpose.msra.mxu0 %v180
  %222 = vmatprep.subr.mxu0 0.0
  %223 = vmatpush1.xpose.msra.mxu0 %v183
  %224 = vmatprep.subr.mxu0 0.0
  %225 = vmatpush1.xpose.msra.mxu0 %v186
  %226 = vmatprep.subr.mxu0 0.0
  %227 = vmatpush1.xpose.msra.mxu0 %v189
  %228 = vmatprep.subr.mxu0 0.0
  %229 = vmatpush1.xpose.msra.mxu0 %v192
  %230 = vmatprep.subr.mxu0 0.0
  %231 = vmatpush1.xpose.msra.mxu0 %v195
  %232 = vmatprep.subr.mxu0 0.0
  %233 = vmatpush1.xpose.msra.mxu0 %v198
  %234 = vmatprep.subr.mxu0 0.0
  %235 = vmatpush1.xpose.msra.mxu0 %v201
  %236 = vmatprep.subr.mxu0 0.0
  %237 = vmatpush1.xpose.msra.mxu0 %v204
  %238 = vmatprep.subr.mxu0 0.0
  %239 = vmatpush1.xpose.msra.mxu0 0.0
  %240 = vmatprep.subr.mxu0 0.0
  %241 = vmatpush1.xpose.msra.mxu0 0.0
  %242 = vmatprep.subr.mxu0 0.0
  %243 = vmatpush1.xpose.msra.mxu0 0.0
  %244 = vmatprep.subr.mxu0 0.0
  %245 = vmatpush1.xpose.msra.mxu0 0.0
  %246 = vmatprep.subr.mxu0 0.0
  %247 = vmatpush1.xpose.msra.mxu0 0.0
  %248 = vmatprep.subr.mxu0 0.0
  %249 = vmatpush1.xpose.msra.mxu0 0.0
  %250 = vmatprep.subr.mxu0 0.0
  %251 = vmatpush1.xpose.msra.mxu0 0.0
  %252 = vmatprep.subr.mxu0 0.0
  %253 = vmatpush1.xpose.msra.mxu0 0.0
  %254 = vmatprep.subr.mxu0 0.0
  %255 = vmatpush1.xpose.msra.mxu0 0.0
  %256 = vmatprep.subr.mxu0 0.0
  %257 = vmatpush1.xpose.msra.mxu0 0.0
  %258 = vmatprep.subr.mxu0 0.0
  %259 = vmatpush1.xpose.msra.mxu0 0.0
  %260 = vmatprep.subr.mxu0 0.0
  %261 = vmatpush1.xpose.msra.mxu0 0.0
  %262 = vmatprep.subr.mxu0 0.0
  %263 = vmatpush1.xpose.msra.mxu0 0.0
  %264 = vmatprep.subr.mxu0 0.0
  %265 = vmatpush1.xpose.msra.mxu0 0.0
  %266 = vmatprep.subr.mxu0 0.0
  %267 = vmatpush1.xpose.msra.mxu0 0.0
  %268 = vmatprep.subr.mxu0 0.0
  %269 = vmatpush1.xpose.msra.mxu0 0.0
  %270 = vmatprep.mubr.f32.mxu0 0.0
  %271 = vmatmul.mubr.f32.gmra.mrb[0].mxu0 %v153
  %v272 = vpop.f32.mrb[0].mxu0
  %v273 = vadd.f32 %v150, %v272
  %v274 = vpop.f32.mrb[0].mxu0
  %275 = vmatprep.mubr.f32.mxu0 0.0
  %276 = vmatmul.mubr.f32.gmra.mrb[0].mxu0 %v156
  %v277 = vpop.f32.mrb[0].mxu0
  %v278 = vadd.f32 %v150, %v277
  %v279 = vpop.f32.mrb[0].mxu0
  %280 = vdwg.mxu0
  %281 = vst [vmem:[%s5] sm:$0xff] %v273
  %282 = vst [vmem:[%s5 + $0x8] sm:$0xff] %v278
  // Predicated region
  $region22: #{model_head_forward.1} parent=0 // pred_check
    _
  $region23: #{model_head_forward.1} parent=0 // pred_check_branch
    %284 = sbr.rel (0) target = $region25
  $region24: #{model_head_forward.1} parent=0 // pred_region
    _
  $region25: #{model_head_forward.1} parent=0 // pred_fallthru
    _
  // Predicated region
  $region26: #{model_head_forward.1} parent=0 // pred_check
    _
  $region27: #{model_head_forward.1} parent=0 // pred_check_branch
    %286 = sbr.rel (0) target = $region29
  $region28: #{model_head_forward.1} parent=0 // pred_region
    _
  $region29: #{model_head_forward.1} parent=0 // pred_fallthru
    _

</llo_original>
